<compile_context>
chip_gen: v7x
topology: tpu7x:2x2x1
jax: 0.10.0
libtpu: 0.0.40
codegen_flags: <defaults>
</compile_context>

<pallas_src>
import functools

import numpy as np
import jax
import jax.numpy as jnp
from jax import lax
from jax.experimental import pallas as pl
from jax.experimental.pallas import tpu as pltpu

# Matcher "parameters" (from __init__, deterministic)
COST_CLASS = 1.0
COST_FOCAL = 1.0
COST_DICE = 1.0
INSTANCE_IGNORE = -1
BATCH_PENALTY = 1.0e6

# Logit used to pad the point/query axes: softplus(_NEG_PAD)=0 and
# sigmoid(_NEG_PAD)=0 (and target-mask padding is 0), so padded columns contribute
# exactly nothing to the real entries.
_NEG_PAD = -1.0e4


def _round_up(v, m):
    return (v + m - 1) // m * m


def _cost_kernel(x_ref, t_ref, static_ref, c_ref,
                 acc_xt, acc_stts, acc_sp, acc_sx,
                 *, inv_n, matmul_dtype):
    """One (TQ, TP, TN) grid step of the [Q, P] matching cost matrix."""
    k = pl.program_id(2)

    @pl.when(k == 0)
    def _init():
        acc_xt[...] = jnp.zeros_like(acc_xt)
        acc_stts[...] = jnp.zeros_like(acc_stts)
        acc_sp[...] = jnp.zeros_like(acc_sp)
        acc_sx[...] = jnp.zeros_like(acc_sx)

    x = x_ref[...]                        # [TQ, TN] mask logits (matmul dtype)
    t = t_ref[...]                        # [TP, TN] binary target masks (matmul dtype)
    xf = x.astype(jnp.float32)

    # Elementwise (f32):
    #   softplus(x) = max(x, 0) + log1p(exp(-|x|))
    #   sigmoid(x)  = 0.5 * tanh(0.5 x) + 0.5   (single EUP op, no reciprocal)
    e = jnp.exp(-jnp.abs(xf))
    softplus_x = jnp.maximum(xf, 0.0) + jnp.log1p(e)
    sig = 0.5 * jnp.tanh(0.5 * xf) + 0.5

    dims = (((1,), (1,)), ((), ()))       # contract over N (last dim of both operands)

    # Focal cost folded into ONE matmul (negation hoisted to the finalize step):
    #   pos@t^T + neg@(1-t)^T == rowsum(softplus(x)) - x@t^T
    acc_xt[...] += lax.dot_general(x, t, dims, preferred_element_type=jnp.float32)

    # Dice-numerator matmul.  A block of ones rows is folded into the LHS so that
    # rowsum(t) (needed for the dice denominator) shares the same RHS weight load
    # instead of paying a separate ones-row matmul, and arrives lane-major (no
    # sublane->lane transpose at finalize).
    sig_b = sig.astype(matmul_dtype)
    ones_rows = jnp.ones((8, sig_b.shape[1]), matmul_dtype)
    lhs = jnp.concatenate([sig_b, ones_rows], axis=0)            # [TQ + 8, TN]
    acc_stts[...] += lax.dot_general(lhs, t, dims, preferred_element_type=jnp.float32)

    # Row sums for the focal broadcast term and the dice denominator (XLU reduce,
    # uses an otherwise idle slot).
    acc_sp[...] += jnp.sum(softplus_x, axis=-1, keepdims=True)   # [TQ, 1]
    acc_sx[...] += jnp.sum(sig, axis=-1, keepdims=True)          # [TQ, 1]

    @pl.when(k == pl.num_programs(2) - 1)
    def _finalize():
        tq = x_ref.shape[0]
        st = acc_stts[0:tq, :]                                   # sigmoid(x) @ t^T
        ts_row = acc_stts[tq:tq + 1, :]                          # rowsum(t), [1, TP]
        cost_focal = (acc_sp[...] - acc_xt[...]) * inv_n
        denom = acc_sx[...] + ts_row + 1.0
        cost_dice = 1.0 - (2.0 * st + 1.0) / denom               # exact div, finalize-only
        # static_ref already carries COST_CLASS * class cost + the batch penalty.
        c_ref[...] = (COST_FOCAL * cost_focal
                      + COST_DICE * cost_dice
                      + static_ref[...])


def _tpu_vmem_capacity():
    try:
        return int(pltpu.get_tpu_info().vmem_capacity_bytes)
    except Exception:
        return 64 * 1024 * 1024          # conservative (v7x-sized) default


def _vmem_limit_bytes(tq, tp, tn, op_bytes, vmem_cap):
    """Scoped-VMEM limit consistent with the chosen tiles (double-buffered inputs +
    f32 elementwise temporaries + accumulators + headroom), capped at 80% of HW."""
    dbuf = 2 * ((tq + tp) * tn * op_bytes + tq * tp * 4)   # pipelined x, t, static
    temps = 6 * tq * tn * 4                                # f32 elementwise intermediates
    accs = (2 * tq + 8) * tp * 4 + 2 * tq * 4
    out = 2 * tq * tp * 4
    want = dbuf + temps + accs + out + (8 << 20)
    return int(min(max(want, 32 << 20), int(vmem_cap * 0.8)))


def compute_cost_matrix(masks_logits, cls_prob, pred_batch,
                        tgt_masks, tgt_cls, tgt_batch,
                        *, tile_q=128, tile_p=128, tile_n=None,
                        matmul_dtype=jnp.bfloat16):
    """Builds the [Q, P] matching cost matrix with one tiled Pallas kernel."""
    Q, N = masks_logits.shape
    P = tgt_masks.shape[0]
    if Q == 0 or P == 0:
        return jnp.zeros((Q, P), jnp.float32)

    vmem_cap = _tpu_vmem_capacity()
    # Heuristic: 64 MiB VMEM per core => v7x-class chip (2 TensorCores / chip).
    two_core_chip = vmem_cap < 100 * 1024 * 1024
    if tile_n is None:
        tile_n = 4096 if two_core_chip else 8192

    op_bytes = np.dtype(matmul_dtype).itemsize
    TQ = min(tile_q, _round_up(Q, 8))
    TP = min(tile_p, _round_up(P, 128))          # lane-dense output tiles
    q_pad = _round_up(Q, TQ)
    p_pad = _round_up(P, TP)
    # v7x: if the parallel grid collapses to one block, split Q so the second
    # TensorCore gets work (dimension_semantics shards parallel grid axes).
    if two_core_chip and (q_pad // TQ) * (p_pad // TP) < 2 and Q > 8:
        TQ = _round_up((Q + 1) // 2, 8)
        q_pad = _round_up(Q, TQ)
    TN = min(tile_n, _round_up(N, 128))
    n_pad = _round_up(N, TN)

    # Operands stored in HBM in the matmul dtype (cast fused with the pad pass).
    x = jnp.pad(masks_logits.astype(matmul_dtype),
                ((0, q_pad - Q), (0, n_pad - N)), constant_values=_NEG_PAD)
    t = jnp.pad(tgt_masks.astype(matmul_dtype),
                ((0, p_pad - P), (0, n_pad - N)), constant_values=0.0)

    # O(Q*P*C) class-gather cost and O(Q*P) batch penalty hoisted out of the N loop.
    tgt_ids = tgt_cls.astype(jnp.int32)
    ignore = tgt_ids == INSTANCE_IGNORE
    safe_ids = jnp.where(ignore, 0, tgt_ids)
    cost_class = -jnp.take(cls_prob.astype(jnp.float32), safe_ids, axis=1)  # [Q, P]
    cost_class = jnp.where(ignore[None, :], -1.0, cost_class)
    batch_cost = jnp.where(pred_batch[:, None] != tgt_batch[None, :],
                           BATCH_PENALTY, 0.0).astype(jnp.float32)
    static = (COST_CLASS * cost_class + batch_cost).astype(jnp.float32)
    static = jnp.pad(static, ((0, q_pad - Q), (0, p_pad - P)))

    grid = (q_pad // TQ, p_pad // TP, n_pad // TN)
    kernel = functools.partial(_cost_kernel, inv_n=1.0 / float(N),
                               matmul_dtype=matmul_dtype)

    cost_est = pl.CostEstimate(
        flops=int(4 * q_pad * p_pad * n_pad + 16 * q_pad * n_pad * grid[1]),
        transcendentals=int(3 * q_pad * n_pad * grid[1]),
        bytes_accessed=int(op_bytes * (q_pad * n_pad * grid[1]
                                       + p_pad * n_pad * grid[0])
                           + 4 * 2 * q_pad * p_pad),
    )

    c_pad = pl.pallas_call(
        kernel,
        out_shape=jax.ShapeDtypeStruct((q_pad, p_pad), jnp.float32),
        grid_spec=pltpu.PrefetchScalarGridSpec(
            num_scalar_prefetch=0,
            grid=grid,
            in_specs=[
                pl.BlockSpec((TQ, TN), lambda i, j, k: (i, k)),   # mask logits
                pl.BlockSpec((TP, TN), lambda i, j, k: (j, k)),   # target masks
                pl.BlockSpec((TQ, TP), lambda i, j, k: (i, j)),   # class + batch cost
            ],
            out_specs=pl.BlockSpec((TQ, TP), lambda i, j, k: (i, j)),
            scratch_shapes=[
                pltpu.VMEM((TQ, TP), jnp.float32),        # acc x @ t^T
                pltpu.VMEM((TQ + 8, TP), jnp.float32),    # acc [sigmoid(x); 1] @ t^T
                pltpu.VMEM((TQ, 1), jnp.float32),         # acc rowsum softplus(x)
                pltpu.VMEM((TQ, 1), jnp.float32),         # acc rowsum sigmoid(x)
            ]),
        compiler_params=pltpu.CompilerParams(
            dimension_semantics=("parallel", "parallel", "arbitrary"),
            vmem_limit_bytes=_vmem_limit_bytes(TQ, TP, TN, op_bytes, vmem_cap)),
        cost_estimate=cost_est,
    )(x, t, static)

    return c_pad[:Q, :P]


def _linear_sum_assignment(cost_np):
    try:
        from scipy.optimize import linear_sum_assignment
        return linear_sum_assignment(cost_np)
    except ImportError:
        # TODO(synk): Hungarian algorithm (linear_sum_assignment) has no Pallas
        # equivalent; greedy host-side fallback used when scipy is unavailable.
        cost = np.array(cost_np, dtype=np.float64, copy=True)
        m = min(cost.shape)
        rows, cols = [], []
        for _ in range(m):
            r, c = np.unravel_index(np.argmin(cost), cost.shape)
            rows.append(int(r)); cols.append(int(c))
            cost[r, :] = np.inf
            cost[:, c] = np.inf
        order = np.argsort(rows)
        return np.asarray(rows)[order], np.asarray(cols)[order]


def hungarian_matcher_forward(pred, target, **tile_kwargs):
    """JAX/Pallas equivalent of HungarianMatcher.forward."""
    C = compute_cost_matrix(pred["masks_logits"], pred["cls_prob"], pred["batch"],
                            target["masks"], target["cls"], target["batch"],
                            **tile_kwargs)
    C_np = np.asarray(jax.device_get(C), dtype=np.float64)
    idx_pred, idx_target = _linear_sum_assignment(C_np)
    # NOTE: torch returns int64; int64 in JAX needs jax_enable_x64, so use int32.
    return (jnp.asarray(idx_pred, dtype=jnp.int32),
            jnp.asarray(idx_target, dtype=jnp.int32),
            C)


def _reference_cost_matrix(pred, target):
    """Plain numpy (f64) reference mirroring the PyTorch forward."""
    x = np.asarray(pred["masks_logits"], np.float64)
    t = np.asarray(target["masks"], np.float64)
    prob = np.asarray(pred["cls_prob"], np.float64)
    tgt_ids = np.asarray(target["cls"], np.int64).copy()
    ignore = tgt_ids == INSTANCE_IGNORE
    tgt_ids[ignore] = 0

    cost_class = -prob[:, tgt_ids]
    cost_class[:, ignore] = -1.0

    pos = np.maximum(x, 0) - x + np.log1p(np.exp(-np.abs(x)))
    neg = np.maximum(x, 0) + np.log1p(np.exp(-np.abs(x)))
    cost_focal = (pos @ t.T + neg @ (1 - t).T) / x.shape[1]

    sx = 1.0 / (1.0 + np.exp(-x))
    numerator = 2 * (sx @ t.T)
    denominator = sx.sum(-1)[:, None] + t.sum(-1)[None, :]
    cost_dice = 1 - (numerator + 1) / (denominator + 1)

    C = COST_FOCAL * cost_focal + COST_CLASS * cost_class + COST_DICE * cost_dice
    batch_cost = (np.asarray(pred["batch"])[:, None]
                  != np.asarray(target["batch"])[None, :]).astype(np.float64) * 1e6
    return C + batch_cost


if __name__ == "__main__":
    key = jax.random.PRNGKey(0)
    Q, P, N, NUM_CLS = 24, 10, 1000, 8        # preds, targets, points, classes
    k1, k2, k3 = jax.random.split(key, 3)

    masks_logits = jax.random.normal(k1, (Q, N), dtype=jnp.float32) * 2.0
    cls_prob = jax.nn.softmax(jax.random.normal(k2, (Q, NUM_CLS), jnp.float32), -1)
    pred_batch = jnp.repeat(jnp.arange(2, dtype=jnp.int32), Q // 2)          # [Q]

    tgt_masks = (jax.random.uniform(k3, (P, N)) > 0.5).astype(jnp.float32)
    tgt_cls = jnp.array([0, 3, 1, -1, 2, 5, 7, -1, 4, 6], dtype=jnp.int32)   # two ignored
    tgt_batch = jnp.repeat(jnp.arange(2, dtype=jnp.int32), P // 2)           # [P]

    pred = {"masks_logits": masks_logits, "cls_prob": cls_prob, "batch": pred_batch}
    target = {"masks": tgt_masks, "cls": tgt_cls, "batch": tgt_batch}

    # Small tiles exercise the multi-block (Q=3 blocks, N=4 blocks) accumulation grid.
    idx_pred, idx_target, C = hungarian_matcher_forward(
        pred, target, tile_q=8, tile_n=256)
    jax.block_until_ready((idx_pred, idx_target, C))

    C_ref = _reference_cost_matrix(pred, target)
    # bf16 operand storage perturbs the focal/dice costs by ~1e-3; matching quality
    # is unaffected (batch penalty and cost ordering are preserved).
    np.testing.assert_allclose(np.asarray(C), C_ref, rtol=1e-2, atol=1e-2)

    # Default path (generation-aware tiles, bf16 operands).
    C2 = compute_cost_matrix(masks_logits, cls_prob, pred_batch,
                             tgt_masks, tgt_cls, tgt_batch)
    jax.block_until_ready(C2)
    np.testing.assert_allclose(np.asarray(C2), C_ref, rtol=1e-2, atol=1e-2)

    # Full-precision path (matches the module's autocast(enabled=False).float() intent).
    C3 = compute_cost_matrix(masks_logits, cls_prob, pred_batch,
                             tgt_masks, tgt_cls, tgt_batch,
                             matmul_dtype=jnp.float32)
    jax.block_until_ready(C3)
    np.testing.assert_allclose(np.asarray(C3), C_ref, rtol=5e-3, atol=5e-3)

    assert idx_pred.shape == idx_target.shape == (P,)
    pb_np, tb_np = np.asarray(pred_batch), np.asarray(tgt_batch)
    assert np.all(pb_np[np.asarray(idx_pred)] == tb_np[np.asarray(idx_target)])

    print("KERNEL_OK")
</pallas_src>

<mosaic_0001>
module attributes {stable_mosaic.version = 11 : i64} {
  func.func @_cost_kernel(%arg0: i32, %arg1: i32, %arg2: i32, %arg3: memref<8x256xbf16, #tpu.memory_space<vmem>>, %arg4: memref<128x256xbf16, #tpu.memory_space<vmem>>, %arg5: memref<8x128xf32, #tpu.memory_space<vmem>>, %arg6: memref<8x128xf32, #tpu.memory_space<vmem>>, %arg7: memref<8x128xf32, #tpu.memory_space<vmem>>, %arg8: memref<16x128xf32, #tpu.memory_space<vmem>>, %arg9: memref<8x1xf32, #tpu.memory_space<vmem>>, %arg10: memref<8x1xf32, #tpu.memory_space<vmem>>) attributes {dimension_semantics = [#tpu.dimension_semantics<parallel>, #tpu.dimension_semantics<parallel>, #tpu.dimension_semantics<arbitrary>], iteration_bounds = array<i64: 3, 1, 4>, scalar_prefetch = 0 : i64, scratch_operands = 4 : i64, tpu.core_type = #tpu.core_type<tc>, window_params = [{transform_indices = @transform_0, window_bounds = array<i64: 8, 256>}, {transform_indices = @transform_1, window_bounds = array<i64: 128, 256>}, {transform_indices = @transform_2, window_bounds = array<i64: 8, 128>}, {transform_indices = @transform_3, window_bounds = array<i64: 8, 128>}]} {
    %c0_i32 = arith.constant 0 : i32
    %0 = arith.cmpi eq, %arg2, %c0_i32 : i32
    %1 = arith.extui %0 : i1 to i32
    %c0_i32_0 = arith.constant 0 : i32
    %2 = arith.cmpi ne, %1, %c0_i32_0 : i32
    scf.if %2 {
      %cst_30 = arith.constant 0.000000e+00 : f32
      %45 = vector.broadcast %cst_30 : f32 to vector<8x128xf32>
      %c0_31 = arith.constant 0 : index
      %c0_32 = arith.constant 0 : index
      %46 = vector.load %arg7[%c0_31, %c0_32] : memref<8x128xf32, #tpu.memory_space<vmem>>, vector<8x128xf32>
      tpu.vector_store %arg7[%c0_31, %c0_32], %45 {strides = array<i32>} : memref<8x128xf32, #tpu.memory_space<vmem>>, vector<8x128xf32>,
      %cst_33 = arith.constant 0.000000e+00 : f32
      %47 = vector.broadcast %cst_33 : f32 to vector<16x128xf32>
      %c0_34 = arith.constant 0 : index
      %c0_35 = arith.constant 0 : index
      %48 = vector.load %arg8[%c0_34, %c0_35] : memref<16x128xf32, #tpu.memory_space<vmem>>, vector<16x128xf32>
      tpu.vector_store %arg8[%c0_34, %c0_35], %47 {strides = array<i32>} : memref<16x128xf32, #tpu.memory_space<vmem>>, vector<16x128xf32>,
      %cst_36 = arith.constant 0.000000e+00 : f32
      %49 = vector.broadcast %cst_36 : f32 to vector<8x1xf32>
      %c0_37 = arith.constant 0 : index
      %c0_38 = arith.constant 0 : index
      %50 = vector.load %arg9[%c0_37, %c0_38] : memref<8x1xf32, #tpu.memory_space<vmem>>, vector<8x1xf32>
      tpu.vector_store %arg9[%c0_37, %c0_38], %49 {strides = array<i32>} : memref<8x1xf32, #tpu.memory_space<vmem>>, vector<8x1xf32>,
      %cst_39 = arith.constant 0.000000e+00 : f32
      %51 = vector.broadcast %cst_39 : f32 to vector<8x1xf32>
      %c0_40 = arith.constant 0 : index
      %c0_41 = arith.constant 0 : index
      %52 = vector.load %arg10[%c0_40, %c0_41] : memref<8x1xf32, #tpu.memory_space<vmem>>, vector<8x1xf32>
      tpu.vector_store %arg10[%c0_40, %c0_41], %51 {strides = array<i32>} : memref<8x1xf32, #tpu.memory_space<vmem>>, vector<8x1xf32>,
    } else {
    }
    %c0 = arith.constant 0 : index
    %c0_1 = arith.constant 0 : index
    %3 = vector.load %arg3[%c0, %c0_1] : memref<8x256xbf16, #tpu.memory_space<vmem>>, vector<8x256xbf16>
    %c0_2 = arith.constant 0 : index
    %c0_3 = arith.constant 0 : index
    %4 = vector.load %arg4[%c0_2, %c0_3] : memref<128x256xbf16, #tpu.memory_space<vmem>>, vector<128x256xbf16>
    %5 = arith.extf %3 : vector<8x256xbf16> to vector<8x256xf32>
    %6 = math.absf %5 : vector<8x256xf32>
    %cst = arith.constant 0.000000e+00 : f32
    %7 = vector.broadcast %cst : f32 to vector<8x256xf32>
    %8 = arith.subf %7, %6 : vector<8x256xf32>
    %9 = math.exp %8 : vector<8x256xf32>
    %cst_4 = arith.constant 0.000000e+00 : f32
    %10 = vector.broadcast %cst_4 : f32 to vector<8x256xf32>
    %11 = arith.maximumf %5, %10 : vector<8x256xf32>
    %12 = math.log1p %9 : vector<8x256xf32>
    %13 = arith.addf %11, %12 : vector<8x256xf32>
    %cst_5 = arith.constant 5.000000e-01 : f32
    %14 = vector.broadcast %cst_5 : f32 to vector<8x256xf32>
    %15 = arith.mulf %14, %5 : vector<8x256xf32>
    %16 = math.tanh %15 : vector<8x256xf32>
    %cst_6 = arith.constant 5.000000e-01 : f32
    %17 = vector.broadcast %cst_6 : f32 to vector<8x256xf32>
    %18 = arith.mulf %17, %16 : vector<8x256xf32>
    %cst_7 = arith.constant 5.000000e-01 : f32
    %19 = vector.broadcast %cst_7 : f32 to vector<8x256xf32>
    %20 = arith.addf %18, %19 : vector<8x256xf32>
    %c0_8 = arith.constant 0 : index
    %c0_9 = arith.constant 0 : index
    %21 = vector.load %arg7[%c0_8, %c0_9] : memref<8x128xf32, #tpu.memory_space<vmem>>, vector<8x128xf32>
    %cst_10 = arith.constant dense<0.000000e+00> : vector<8x128xf32>
    %22 = tpu.matmul %3, %4, %cst_10 {dimension_numbers = #tpu.dot_dimension_numbers<[1], [1], [0], [0], [0, 0, 1, 0], [], []>} : vector<8x256xbf16>, vector<128x256xbf16>, vector<8x128xf32> -> vector<8x128xf32>
    %23 = arith.addf %21, %22 : vector<8x128xf32>
    %c0_11 = arith.constant 0 : index
    %c0_12 = arith.constant 0 : index
    %24 = vector.load %arg7[%c0_11, %c0_12] : memref<8x128xf32, #tpu.memory_space<vmem>>, vector<8x128xf32>
    tpu.vector_store %arg7[%c0_11, %c0_12], %23 {strides = array<i32>} : memref<8x128xf32, #tpu.memory_space<vmem>>, vector<8x128xf32>,
    %25 = arith.truncf %20 : vector<8x256xf32> to vector<8x256xbf16>
    %cst_13 = arith.constant 1.000000e+00 : bf16
    %26 = vector.broadcast %cst_13 : bf16 to vector<8x256xbf16>
    %27 = tpu.concatenate %25, %26 in 0 : vector<8x256xbf16>, vector<8x256xbf16> -> vector<16x256xbf16>
    %c0_14 = arith.constant 0 : index
    %c0_15 = arith.constant 0 : index
    %28 = vector.load %arg8[%c0_14, %c0_15] : memref<16x128xf32, #tpu.memory_space<vmem>>, vector<16x128xf32>
    %cst_16 = arith.constant dense<0.000000e+00> : vector<16x128xf32>
    %29 = tpu.matmul %27, %4, %cst_16 {dimension_numbers = #tpu.dot_dimension_numbers<[1], [1], [0], [0], [0, 0, 1, 0], [], []>} : vector<16x256xbf16>, vector<128x256xbf16>, vector<16x128xf32> -> vector<16x128xf32>
    %30 = arith.addf %28, %29 : vector<16x128xf32>
    %c0_17 = arith.constant 0 : index
    %c0_18 = arith.constant 0 : index
    %31 = vector.load %arg8[%c0_17, %c0_18] : memref<16x128xf32, #tpu.memory_space<vmem>>, vector<16x128xf32>
    tpu.vector_store %arg8[%c0_17, %c0_18], %30 {strides = array<i32>} : memref<16x128xf32, #tpu.memory_space<vmem>>, vector<16x128xf32>,
    %c0_19 = arith.constant 0 : index
    %c0_20 = arith.constant 0 : index
    %32 = vector.load %arg9[%c0_19, %c0_20] : memref<8x1xf32, #tpu.memory_space<vmem>>, vector<8x1xf32>
    %cst_21 = arith.constant dense<0.000000e+00> : vector<8xf32>
    %33 = vector.multi_reduction <add>, %13, %cst_21 [1] : vector<8x256xf32> to vector<8xf32>
    %34 = vector.shape_cast %33 : vector<8xf32> to vector<8x1xf32>
    %35 = arith.addf %32, %34 : vector<8x1xf32>
    %c0_22 = arith.constant 0 : index
    %c0_23 = arith.constant 0 : index
    %36 = vector.load %arg9[%c0_22, %c0_23] : memref<8x1xf32, #tpu.memory_space<vmem>>, vector<8x1xf32>
    tpu.vector_store %arg9[%c0_22, %c0_23], %35 {strides = array<i32>} : memref<8x1xf32, #tpu.memory_space<vmem>>, vector<8x1xf32>,
    %c0_24 = arith.constant 0 : index
    %c0_25 = arith.constant 0 : index
    %37 = vector.load %arg10[%c0_24, %c0_25] : memref<8x1xf32, #tpu.memory_space<vmem>>, vector<8x1xf32>
    %cst_26 = arith.constant dense<0.000000e+00> : vector<8xf32>
    %38 = vector.multi_reduction <add>, %20, %cst_26 [1] : vector<8x256xf32> to vector<8xf32>
    %39 = vector.shape_cast %38 : vector<8xf32> to vector<8x1xf32>
    %40 = arith.addf %37, %39 : vector<8x1xf32>
    %c0_27 = arith.constant 0 : index
    %c0_28 = arith.constant 0 : index
    %41 = vector.load %arg10[%c0_27, %c0_28] : memref<8x1xf32, #tpu.memory_space<vmem>>, vector<8x1xf32>
    tpu.vector_store %arg10[%c0_27, %c0_28], %40 {strides = array<i32>} : memref<8x1xf32, #tpu.memory_space<vmem>>, vector<8x1xf32>,
    %c3_i32 = arith.constant 3 : i32
    %42 = arith.cmpi eq, %arg2, %c3_i32 : i32
    %43 = arith.extui %42 : i1 to i32
    %c0_i32_29 = arith.constant 0 : i32
    %44 = arith.cmpi ne, %43, %c0_i32_29 : i32
    scf.if %44 {
      %c0_30 = arith.constant 0 : index
      %c0_31 = arith.constant 0 : index
      %45 = vector.load %arg8[%c0_30, %c0_31] : memref<16x128xf32, #tpu.memory_space<vmem>>, vector<8x128xf32>
      %c8 = arith.constant 8 : index
      %c0_32 = arith.constant 0 : index
      %46 = vector.load %arg8[%c8, %c0_32] : memref<16x128xf32, #tpu.memory_space<vmem>>, vector<1x128xf32>
      %c0_33 = arith.constant 0 : index
      %c0_34 = arith.constant 0 : index
      %47 = vector.load %arg9[%c0_33, %c0_34] : memref<8x1xf32, #tpu.memory_space<vmem>>, vector<8x1xf32>
      %c0_35 = arith.constant 0 : index
      %c0_36 = arith.constant 0 : index
      %48 = vector.load %arg7[%c0_35, %c0_36] : memref<8x128xf32, #tpu.memory_space<vmem>>, vector<8x128xf32>
      %49 = vector.broadcast %47 : vector<8x1xf32> to vector<8x128xf32>
      %50 = arith.subf %49, %48 : vector<8x128xf32>
      %cst_37 = arith.constant 1.000000e-03 : f32
      %51 = vector.broadcast %cst_37 : f32 to vector<8x128xf32>
      %52 = arith.mulf %50, %51 : vector<8x128xf32>
      %c0_38 = arith.constant 0 : index
      %c0_39 = arith.constant 0 : index
      %53 = vector.load %arg10[%c0_38, %c0_39] : memref<8x1xf32, #tpu.memory_space<vmem>>, vector<8x1xf32>
      %54 = vector.broadcast %53 : vector<8x1xf32> to vector<8x128xf32>
      %55 = vector.broadcast %46 : vector<1x128xf32> to vector<8x128xf32>
      %56 = arith.addf %54, %55 : vector<8x128xf32>
      %cst_40 = arith.constant 1.000000e+00 : f32
      %57 = vector.broadcast %cst_40 : f32 to vector<8x128xf32>
      %58 = arith.addf %56, %57 : vector<8x128xf32>
      %cst_41 = arith.constant 2.000000e+00 : f32
      %59 = vector.broadcast %cst_41 : f32 to vector<8x128xf32>
      %60 = arith.mulf %59, %45 : vector<8x128xf32>
      %cst_42 = arith.constant 1.000000e+00 : f32
      %61 = vector.broadcast %cst_42 : f32 to vector<8x128xf32>
      %62 = arith.addf %60, %61 : vector<8x128xf32>
      %63 = arith.divf %62, %58 : vector<8x128xf32>
      %cst_43 = arith.constant 1.000000e+00 : f32
      %64 = vector.broadcast %cst_43 : f32 to vector<8x128xf32>
      %65 = arith.subf %64, %63 : vector<8x128xf32>
      %cst_44 = arith.constant 1.000000e+00 : f32
      %66 = vector.broadcast %cst_44 : f32 to vector<8x128xf32>
      %67 = arith.mulf %66, %52 : vector<8x128xf32>
      %cst_45 = arith.constant 1.000000e+00 : f32
      %68 = vector.broadcast %cst_45 : f32 to vector<8x128xf32>
      %69 = arith.mulf %68, %65 : vector<8x128xf32>
      %70 = arith.addf %67, %69 : vector<8x128xf32>
      %c0_46 = arith.constant 0 : index
      %c0_47 = arith.constant 0 : index
      %71 = vector.load %arg5[%c0_46, %c0_47] : memref<8x128xf32, #tpu.memory_space<vmem>>, vector<8x128xf32>
      %72 = arith.addf %70, %71 : vector<8x128xf32>
      %c0_48 = arith.constant 0 : index
      %c0_49 = arith.constant 0 : index
      %73 = vector.load %arg6[%c0_48, %c0_49] : memref<8x128xf32, #tpu.memory_space<vmem>>, vector<8x128xf32>
      tpu.vector_store %arg6[%c0_48, %c0_49], %72 {strides = array<i32>} : memref<8x128xf32, #tpu.memory_space<vmem>>, vector<8x128xf32>,
    } else {
    }
    return
  }
  func.func @transform_0(%arg0: i32, %arg1: i32, %arg2: i32) -> (i32, i32) {
    %c0_i32 = arith.constant 0 : i32
    return %arg0, %arg2 : i32, i32
  }
  func.func @transform_1(%arg0: i32, %arg1: i32, %arg2: i32) -> (i32, i32) {
    %c0_i32 = arith.constant 0 : i32
    return %arg1, %arg2 : i32, i32
  }
  func.func @transform_2(%arg0: i32, %arg1: i32, %arg2: i32) -> (i32, i32) {
    %c0_i32 = arith.constant 0 : i32
    return %arg0, %arg1 : i32, i32
  }
  func.func @transform_3(%arg0: i32, %arg1: i32, %arg2: i32) -> (i32, i32) {
    %c0_i32 = arith.constant 0 : i32
    return %arg0, %arg1 : i32, i32
  }
}

</mosaic_0001>

<llo_original>
// kernel: tpu_custom_call.1
$region0: #{tpu_custom_call.1}
  #allocation0 [shape = 'u32[]', space=smem, size = 0x4, offset = 0x4, fixed_abs, tag = 'smem constant byte address 0x4 - core index']
  #allocation1 [shape = 'u32[144,128]{1,0:T(1,128)}', space=vmem, size = 0x12000, scoped, tag = 'internal scratch']
  #allocation2 [shape = 'f32[8,128]{1,0:T(8,128)}', space=vmem, size = 0x1000, scoped, tag = 'scratch operand']
  #allocation3 [shape = 'f32[16,128]{1,0:T(8,128)}', space=vmem, size = 0x2000, scoped, tag = 'scratch operand']
  #allocation4 [shape = 'f32[8,1]{1,0:T(8,128)}', space=vmem, size = 0x1000, scoped, tag = 'scratch operand']
  #allocation5 [shape = 'f32[8,1]{1,0:T(8,128)}', space=vmem, size = 0x1000, scoped, tag = 'scratch operand']
  %s0 = inlined_call_operand.hbm [shape: bf16[24,1024], index: 0, kind: input, shape index: {}]
  %s1 = inlined_call_operand.hbm [shape: bf16[128,1024], index: 1, kind: input, shape index: {}]
  %s2 = inlined_call_operand.hbm [shape: f32[24,128], index: 2, kind: input, shape index: {}]
  %s3 = inlined_call_operand.hbm [shape: f32[24,128], index: 3, kind: output, shape index: {}]
  %s4 = sld [smem:[#allocation0]]
  $region65: #{tpu_custom_call.1} parent=0
    _
  %s6 = ssub.s32 1, %s4
  %s7 = scalar_select 0, %s6, %s4
  $region1: #{tpu_custom_call.1} parent=0
    #allocation6 [shape = 'u8[8192]{0}', space=vmem, size = 0x2000, scoped, tag = 'input window, operand 0']
    #allocation7 [shape = 's32[2]{0}', space=sflag, size = 0x8, scoped, tag = 'scoped memory for tpu_custom_call.1']
    #allocation8 [shape = 's32[2]{0}', space=sflag, size = 0x8, scoped, tag = 'scoped memory for tpu_custom_call.1']
    #allocation9 [shape = 'u8[131072]{0}', space=vmem, size = 0x20000, scoped, tag = 'input window, operand 1']
    #allocation10 [shape = 's32[2]{0}', space=sflag, size = 0x8, scoped, tag = 'scoped memory for tpu_custom_call.1']
    #allocation11 [shape = 'u8[8192]{0}', space=vmem, size = 0x2000, scoped, tag = 'input window, operand 2']
    #allocation12 [shape = 'u8[8192]{0}', space=vmem, size = 0x2000, scoped, tag = 'output window, operand 0']
    %8 = vsyncpa [#allocation7], 0
    %s9 = scalar_lea.sflag [#allocation7], 1
    %10 = vsyncpa %s9, 0
    %11 = vsyncpa [#allocation10], 0
    %s12 = scalar_lea.sflag [#allocation10], 1
    %13 = vsyncpa %s12, 0
    %14 = vsyncpa [#allocation8], 0
    %s15 = scalar_lea.sflag [#allocation8], 1
    %16 = vsyncpa %s15, 0
    loop: start=0, step=1, limit=14
    $region2: #{tpu_custom_call.1} parent=1 // loop_pre_header
      _
    $region3: #{tpu_custom_call.1} parent=1 // loop_header
      %s18 = sphi 0, %s22
      %p19 = scmp.ge.s32.totalorder %s18, 14
      %s25 = sphi 0, %s44
      %s26 = sphi 0, %s40
      %s27 = sphi 0, %s36
      %s28 = sphi 0, %s25
      %s29 = sphi 0, %s26
      %s30 = sphi 0, %s27
      %s31 = sphi 0, %s28
      %s32 = sphi 0, %s29
      %s33 = sphi 0, %s30
      %s49 = sphi 0, %s51
      %s52 = sphi 0, %s49
      %s53 = sphi 0, %s52
      %s69 = sphi 0, %s53
      %s77 = sphi 0, %s79
      %s80 = sphi 0, %s77
      %s81 = sphi 0, %s80
      %s97 = sphi 0, %s81
      %s105 = sphi 0, %s107
      %s108 = sphi 0, %s105
      %s109 = sphi 0, %s108
      %s125 = sphi 0, %s109
      %s133 = sphi 0, %s135
      %s136 = sphi 0, %s133
      %s137 = sphi 0, %s136
      %s153 = sphi 0, %s137
    $region4: #{tpu_custom_call.1} parent=1 // loop_header_branch
      %21 = sbr.rel (%p19) target = $region8
    $region5: #{tpu_custom_call.1} parent=1 // loop_body
      %s23 = ssub.s32 %s18, 1
      %s24 = ssub.s32 %s18, 2
      %s34 = sadd.s32 1, %s27
      %p35 = scmp.ge.s32.totalorder %s34, 4
      %s36 = scalar_select %p35, 0, %s34
      %s37 = sadd.s32 1, %s26
      %s38 = scalar_select %p35, %s37, %s26
      %p39 = scmp.ge.s32.totalorder %s38, 1
      %s40 = scalar_select %p39, 0, %s38
      %s41 = sadd.s32 1, %s25
      %s42 = scalar_select %p39, %s41, %s25
      %p43 = scmp.ge.s32.totalorder %s42, 3
      %s44 = scalar_select %p43, 0, %s42
      %s45 = ssub.s32 %s25, %s44
      %s46 = ssub.s32 %s27, %s36
      %s47 = sor.u32 %s45, %s46
      %p48 = scmp.eq.s32.totalorder %s47, 0
      %s50 = sadd.s32 %s49, 1
      %s51 = scalar_select %p48, %s49, %s50
      %p54 = pneg %p48
      %p55 = scmp.eq.s32.totalorder %s18, 11
      %p56 = por %p54, %p55
      %p57 = scmp.ne.s32.totalorder %s49, %s52
      %p58 = scmp.eq.s32.totalorder %s18, 0
      %p59 = por %p57, %p58
      %p60 = scmp.ne.s32.totalorder %s49, %s52
      %p61 = scmp.eq.s32.totalorder %s23, 11
      %p62 = por %p60, %p61
      %p63 = scmp.ne.s32.totalorder %s52, %s53
      %p64 = scmp.eq.s32.totalorder %s23, 0
      %p65 = por %p63, %p64
      %p66 = scmp.ne.s32.totalorder %s52, %s53
      %p67 = scmp.eq.s32.totalorder %s24, 11
      %p68 = por %p66, %p67
      %p70 = scmp.ne.s32.totalorder %s53, %s69
      %p71 = scmp.eq.s32.totalorder %s24, 0
      %p72 = por %p70, %p71
      %s73 = ssub.s32 %s26, %s40
      %s74 = ssub.s32 %s27, %s36
      %s75 = sor.u32 %s73, %s74
      %p76 = scmp.eq.s32.totalorder %s75, 0
      %s78 = sadd.s32 %s77, 1
      %s79 = scalar_select %p76, %s77, %s78
      %p82 = pneg %p76
      %p83 = scmp.eq.s32.totalorder %s18, 11
      %p84 = por %p82, %p83
      %p85 = scmp.ne.s32.totalorder %s77, %s80
      %p86 = scmp.eq.s32.totalorder %s18, 0
      %p87 = por %p85, %p86
      %p88 = scmp.ne.s32.totalorder %s77, %s80
      %p89 = scmp.eq.s32.totalorder %s23, 11
      %p90 = por %p88, %p89
      %p91 = scmp.ne.s32.totalorder %s80, %s81
      %p92 = scmp.eq.s32.totalorder %s23, 0
      %p93 = por %p91, %p92
      %p94 = scmp.ne.s32.totalorder %s80, %s81
      %p95 = scmp.eq.s32.totalorder %s24, 11
      %p96 = por %p94, %p95
      %p98 = scmp.ne.s32.totalorder %s81, %s97
      %p99 = scmp.eq.s32.totalorder %s24, 0
      %p100 = por %p98, %p99
      %s101 = ssub.s32 %s25, %s44
      %s102 = ssub.s32 %s26, %s40
      %s103 = sor.u32 %s101, %s102
      %p104 = scmp.eq.s32.totalorder %s103, 0
      %s106 = sadd.s32 %s105, 1
      %s107 = scalar_select %p104, %s105, %s106
      %p110 = pneg %p104
      %p111 = scmp.eq.s32.totalorder %s18, 11
      %p112 = por %p110, %p111
      %p113 = scmp.ne.s32.totalorder %s105, %s108
      %p114 = scmp.eq.s32.totalorder %s18, 0
      %p115 = por %p113, %p114
      %p116 = scmp.ne.s32.totalorder %s105, %s108
      %p117 = scmp.eq.s32.totalorder %s23, 11
      %p118 = por %p116, %p117
      %p119 = scmp.ne.s32.totalorder %s108, %s109
      %p120 = scmp.eq.s32.totalorder %s23, 0
      %p121 = por %p119, %p120
      %p122 = scmp.ne.s32.totalorder %s108, %s109
      %p123 = scmp.eq.s32.totalorder %s24, 11
      %p124 = por %p122, %p123
      %p126 = scmp.ne.s32.totalorder %s109, %s125
      %p127 = scmp.eq.s32.totalorder %s24, 0
      %p128 = por %p126, %p127
      %s129 = ssub.s32 %s25, %s44
      %s130 = ssub.s32 %s26, %s40
      %s131 = sor.u32 %s129, %s130
      %p132 = scmp.eq.s32.totalorder %s131, 0
      %s134 = sadd.s32 %s133, 1
      %s135 = scalar_select %p132, %s133, %s134
      %p138 = pneg %p132
      %p139 = scmp.eq.s32.totalorder %s18, 11
      %p140 = por %p138, %p139
      %p141 = scmp.ne.s32.totalorder %s133, %s136
      %p142 = scmp.eq.s32.totalorder %s18, 0
      %p143 = por %p141, %p142
      %p144 = scmp.ne.s32.totalorder %s133, %s136
      %p145 = scmp.eq.s32.totalorder %s23, 11
      %p146 = por %p144, %p145
      %p147 = scmp.ne.s32.totalorder %s136, %s137
      %p148 = scmp.eq.s32.totalorder %s23, 0
      %p149 = por %p147, %p148
      %p150 = scmp.ne.s32.totalorder %s136, %s137
      %p151 = scmp.eq.s32.totalorder %s24, 11
      %p152 = por %p150, %p151
      %p154 = scmp.ne.s32.totalorder %s137, %s153
      %p155 = scmp.eq.s32.totalorder %s24, 0
      %p156 = por %p154, %p155
      %p157 = scmp.le.s32.totalorder 1, %s18
      %p158 = scmp.lt.s32.totalorder %s18, 13
      %p159 = pnand %p157, %p158
      %p160 = pneg %p159
      // Predicated region
      $region9: #{tpu_custom_call.1} parent=5 // pred_check
        _
      $region10: #{tpu_custom_call.1} parent=5 // pred_check_branch
        %162 = sbr.rel (%p159) target = $region12
      $region11: #{tpu_custom_call.1} parent=5 // pred_region
        %s163 = ssub.s32 %s18, 1
      $region12: #{tpu_custom_call.1} parent=5 // pred_fallthru
        _
      %p164 = scmp.lt.s32.totalorder %s18, 12
      // Predicated region
      $region13: #{tpu_custom_call.1} parent=5 // pred_check
        %p165 = pneg %p164
      $region14: #{tpu_custom_call.1} parent=5 // pred_check_branch
        %167 = sbr.rel (%p165) target = $region16
      $region15: #{tpu_custom_call.1} parent=5 // pred_region
        // Predicated region
        $region17: #{tpu_custom_call.1} parent=15 // pred_check
          %p168 = pneg %p59
        $region18: #{tpu_custom_call.1} parent=15 // pred_check_branch
          %170 = sbr.rel (%p168) target = $region20
        $region19: #{tpu_custom_call.1} parent=15 // pred_region
          %s171 = sand.u32 %s49, 1
          %s172 = scalar_lea.sflag [#allocation7], %s171
          %s173 = sand.u32 %s49, 1
          %s174 = smul.addr %s173, 8
          %s175 = scalar_lea.vmem [#allocation6], %s174
          %s176 = smul.u32 2, %s27
          %s178 = ssub.s32 128, 128
          %179 = vsyncadd %s172, %s178
          %s180 = smul.addr %s25, 8
          %s181 = sadd.s32 %s176, %s180
          %s182 = smul.addr %s181, 64
          %s183 = scalar_lea.hbm %s0, %s182
          %s185 = sshll.u32 %s175, 4
          %s186 = int_to_ptr.vmem [resolvable:$true] %s185
          %188 = dma.hbm_to_vmem [thread:$0]  %s183, 128, %s186, %s172
        $region20: #{tpu_custom_call.1} parent=15 // pred_fallthru
          _
        // Predicated region
        $region21: #{tpu_custom_call.1} parent=15 // pred_check
          %p189 = pneg %p87
        $region22: #{tpu_custom_call.1} parent=15 // pred_check_branch
          %191 = sbr.rel (%p189) target = $region24
        $region23: #{tpu_custom_call.1} parent=15 // pred_region
          %s192 = sand.u32 %s18, 1
          %s193 = scalar_lea.sflag [#allocation10], %s192
          %s194 = sand.u32 %s77, 1
          %s195 = smul.addr %s194, 128
          %s196 = scalar_lea.vmem [#allocation9], %s195
          %s197 = smul.u32 16, %s26
          %s198 = smul.u32 2, %s27
          %s200 = ssub.s32 2048, 2048
          %201 = vsyncadd %s193, %s200
          %s202 = smul.addr %s197, 8
          %s203 = sadd.s32 %s198, %s202
          %s204 = smul.addr %s203, 64
          %s205 = scalar_lea.hbm %s1, %s204
          %s206 = sshll.u32 %s196, 4
          %s207 = int_to_ptr.vmem [resolvable:$true] %s206
          %212 = dma.hbm_to_vmem [thread:$0]  %s205, 2048, %s207, %s193, 512, 128, 8
        $region24: #{tpu_custom_call.1} parent=15 // pred_fallthru
          _
        // Predicated region
        $region25: #{tpu_custom_call.1} parent=15 // pred_check
          %p213 = pneg %p115
        $region26: #{tpu_custom_call.1} parent=15 // pred_check_branch
          %215 = sbr.rel (%p213) target = $region28
        $region27: #{tpu_custom_call.1} parent=15 // pred_region
          %s216 = sand.u32 %s18, 1
          %s217 = scalar_lea.sflag [#allocation10], %s216
          %s218 = sand.u32 %s105, 1
          %s219 = smul.addr %s218, 8
          %s220 = scalar_lea.vmem [#allocation11], %s219
          %s222 = ssub.s32 128, 128
          %223 = vsyncadd %s217, %s222
          %s224 = sadd.s32 %s26, %s25
          %s225 = smul.addr %s224, 128
          %s226 = scalar_lea.hbm %s2, %s225
          %s228 = sshll.u32 %s220, 4
          %s229 = int_to_ptr.vmem [resolvable:$true] %s228
          %231 = dma.hbm_to_vmem [thread:$0]  %s226, 128, %s229, %s217
        $region28: #{tpu_custom_call.1} parent=15 // pred_fallthru
          _
      $region16: #{tpu_custom_call.1} parent=5 // pred_fallthru
        _
      %p232 = scmp.le.s32.totalorder 1, %s18
      %p233 = scmp.lt.s32.totalorder %s18, 13
      %p234 = pnand %p232, %p233
      %p235 = pneg %p234
      // Predicated region
      $region29: #{tpu_custom_call.1} parent=5 // pred_check
        _
      $region30: #{tpu_custom_call.1} parent=5 // pred_check_branch
        %237 = sbr.rel (%p234) target = $region32
      $region31: #{tpu_custom_call.1} parent=5 // pred_region
        %s238 = ssub.s32 %s18, 1
        %s239 = sand.u32 %s52, 1
        %s240 = scalar_lea.sflag [#allocation7], %s239
        %s241 = sand.u32 %s52, 1
        %s242 = smul.addr %s241, 8
        %s243 = scalar_lea.vmem [#allocation6], %s242
        // Predicated region
        $region33: #{tpu_custom_call.1} parent=31 // pred_check
          %p244 = pneg %p65
        $region34: #{tpu_custom_call.1} parent=31 // pred_check_branch
          %246 = sbr.rel (%p244) target = $region36
        $region35: #{tpu_custom_call.1} parent=31 // pred_region
          %247 = dma.done %s240, 128
        $region36: #{tpu_custom_call.1} parent=31 // pred_fallthru
          _
        %s248 = sand.u32 %s23, 1
        %s249 = scalar_lea.sflag [#allocation10], %s248
        %s250 = sand.u32 %s80, 1
        %s251 = smul.addr %s250, 128
        %s252 = scalar_lea.vmem [#allocation9], %s251
        // Predicated region
        $region37: #{tpu_custom_call.1} parent=31 // pred_check
          %p253 = pneg %p93
        $region38: #{tpu_custom_call.1} parent=31 // pred_check_branch
          %255 = sbr.rel (%p253) target = $region40
        $region39: #{tpu_custom_call.1} parent=31 // pred_region
          %256 = dma.done %s249, 2048
        $region40: #{tpu_custom_call.1} parent=31 // pred_fallthru
          _
        %s257 = sand.u32 %s23, 1
        %s258 = scalar_lea.sflag [#allocation10], %s257
        %s259 = sand.u32 %s108, 1
        %s260 = smul.addr %s259, 8
        %s261 = scalar_lea.vmem [#allocation11], %s260
        // Predicated region
        $region41: #{tpu_custom_call.1} parent=31 // pred_check
          %p262 = pneg %p121
        $region42: #{tpu_custom_call.1} parent=31 // pred_check_branch
          %264 = sbr.rel (%p262) target = $region44
        $region43: #{tpu_custom_call.1} parent=31 // pred_region
          %265 = dma.done %s258, 128
        $region44: #{tpu_custom_call.1} parent=31 // pred_fallthru
          _
        %s266 = sand.u32 %s52, 1
        %s267 = scalar_lea.sflag [#allocation7], %s266
        %s268 = sand.u32 %s52, 1
        %s269 = smul.addr %s268, 8
        %s270 = scalar_lea.vmem [#allocation6], %s269
        %p271 = pneg %p65
        %p272 = pneg %p62
        %s273 = sand.u32 %s23, 1
        %s274 = scalar_lea.sflag [#allocation10], %s273
        %s275 = sand.u32 %s80, 1
        %s276 = smul.addr %s275, 128
        %s277 = scalar_lea.vmem [#allocation9], %s276
        %p278 = pneg %p93
        %p279 = pneg %p90
        %s280 = sand.u32 %s23, 1
        %s281 = scalar_lea.sflag [#allocation10], %s280
        %s282 = sand.u32 %s108, 1
        %s283 = smul.addr %s282, 8
        %s284 = scalar_lea.vmem [#allocation11], %s283
        %p285 = pneg %p121
        %p286 = pneg %p118
        %p287 = pneg %p149
        %p288 = pneg %p146
        %s289 = sand.u32 %s136, 1
        %s290 = scalar_lea.sflag [#allocation8], %s289
        %s291 = sand.u32 %s136, 1
        %s292 = smul.addr %s291, 8
        %s293 = scalar_lea.vmem [#allocation12], %s292
        %s294 = smul.u32 2, %s30
        %s295 = smul.u32 16, %s29
        %s296 = smul.u32 2, %s30
        %p299 = scmp.eq.s32.totalorder %s30, 0
        // Predicated region
        $region45: #{tpu_custom_call.1} parent=31 // pred_check
          %p300 = pneg %p299
        $region46: #{tpu_custom_call.1} parent=31 // pred_check_branch
          %302 = sbr.rel (%p300) target = $region48
        $region47: #{tpu_custom_call.1} parent=31 // pred_region
          %303 = vst [vmem:[#allocation2] sm:$0xff] 0.0
          %304 = vst [vmem:[#allocation3] sm:$0xff] 0.0
          %305 = vst [vmem:[#allocation3 + $0x8] sm:$0xff] 0.0
          %vm306 = vcmask 7168
          %307 = vst.msk [vmem:[#allocation4] sm:$0xff] %vm306, 0.0
          %308 = vst.msk [vmem:[#allocation5] sm:$0xff] %vm306, 0.0
        $region48: #{tpu_custom_call.1} parent=31 // pred_fallthru
          _
        %v309 = vld [vmem:[%s243] sm:$0xff]
        %v310 = vld [vmem:[%s252] sm:$0xff]
        %v311 = vld [vmem:[%s252 + $0x8] sm:$0xff]
        %v312 = vld [vmem:[%s252 + $0x10] sm:$0xff]
        %v313 = vld [vmem:[%s252 + $0x18] sm:$0xff]
        %v314 = vld [vmem:[%s252 + $0x20] sm:$0xff]
        %v315 = vld [vmem:[%s252 + $0x28] sm:$0xff]
        %v316 = vld [vmem:[%s252 + $0x30] sm:$0xff]
        %v317 = vld [vmem:[%s252 + $0x38] sm:$0xff]
        %v318 = vld [vmem:[%s252 + $0x40] sm:$0xff]
        %v319 = vld [vmem:[%s252 + $0x48] sm:$0xff]
        %v320 = vld [vmem:[%s252 + $0x50] sm:$0xff]
        %v321 = vld [vmem:[%s252 + $0x58] sm:$0xff]
        %v322 = vld [vmem:[%s252 + $0x60] sm:$0xff]
        %v323 = vld [vmem:[%s252 + $0x68] sm:$0xff]
        %v324 = vld [vmem:[%s252 + $0x70] sm:$0xff]
        %v325 = vld [vmem:[%s252 + $0x78] sm:$0xff]
        %v326 = vunpack.c.l.bf16 %v309
        %v327 = vunpack.c.h.bf16 %v309
        %v328 = vand.u32 2147483647, %v326
        %v329 = vand.u32 2147483647, %v327
        %v330 = vsub.f32 0.0, %v328
        %v331 = vsub.f32 0.0, %v329
        %v332 = vmul.f32 %v330, 1.442695
        %v333 = vpow.pop %v332
        %v334 = vmul.f32 %v331, 1.442695
        %v335 = vpow.pop %v334
        %v336 = vmax.f32 %v326, 0.0
        %v337 = vmax.f32 %v327, 0.0
        %v338 = vadd.f32 %v333, 1.0
        %v339 = vlog2.pop %v338
        %v340 = vmul.f32 %v339, 0.6931472
        %v341 = vmul.f32 -0.5, %v333
        %v342 = vadd.f32 %v341, 1.0
        %v343 = vmul.f32 %v342, %v333
        %v344 = vand.u32 2147483647, %v333
        %vm345 = vcmp.lt.f32.partialorder %v344, 0.0004427343
        %v346 = vsel %vm345, %v343, %v340
        %v347 = vadd.f32 %v335, 1.0
        %v348 = vlog2.pop %v347
        %v349 = vmul.f32 %v348, 0.6931472
        %v350 = vmul.f32 -0.5, %v335
        %v351 = vadd.f32 %v350, 1.0
        %v352 = vmul.f32 %v351, %v335
        %v353 = vand.u32 2147483647, %v335
        %vm354 = vcmp.lt.f32.partialorder %v353, 0.0004427343
        %v355 = vsel %vm354, %v352, %v349
        %v356 = vadd.f32 %v336, %v346
        %v357 = vadd.f32 %v337, %v355
        %v358 = vmul.f32 %v326, 0.5
        %v359 = vmul.f32 %v327, 0.5
        %v360 = vtanh.pop %v358
        %v361 = vtanh.pop %v359
        %v362 = vmul.f32 %v360, 0.5
        %v363 = vmul.f32 %v361, 0.5
        %v364 = vadd.f32 %v362, 0.5
        %v365 = vadd.f32 %v363, 0.5
        %v366 = vld [vmem:[#allocation2] sm:$0xff]
        %v368 = vunpack.c.l.b16 %v309
        %v369 = vunpack.c.h.b16 %v309
        %v370 = vpack.c.b16 %v368, %v368
        %v371 = vpack.c.b16 %v369, %v369
        %v390 = vunpack.c.l.b16 %v310
        %v391 = vunpack.c.h.b16 %v310
        %v392 = vunpack.c.l.b16 %v311
        %v393 = vunpack.c.h.b16 %v311
        %v394 = vunpack.c.l.b16 %v312
        %v395 = vunpack.c.h.b16 %v312
        %v396 = vunpack.c.l.b16 %v313
        %v397 = vunpack.c.h.b16 %v313
        %v398 = vunpack.c.l.b16 %v314
        %v399 = vunpack.c.h.b16 %v314
        %v400 = vunpack.c.l.b16 %v315
        %v401 = vunpack.c.h.b16 %v315
        %v402 = vunpack.c.l.b16 %v316
        %v403 = vunpack.c.h.b16 %v316
        %v404 = vunpack.c.l.b16 %v317
        %v405 = vunpack.c.h.b16 %v317
        %v406 = vunpack.c.l.b16 %v318
        %v407 = vunpack.c.h.b16 %v318
        %v408 = vunpack.c.l.b16 %v319
        %v409 = vunpack.c.h.b16 %v319
        %v410 = vunpack.c.l.b16 %v320
        %v411 = vunpack.c.h.b16 %v320
        %v412 = vunpack.c.l.b16 %v321
        %v413 = vunpack.c.h.b16 %v321
        %v414 = vunpack.c.l.b16 %v322
        %v415 = vunpack.c.h.b16 %v322
        %v416 = vunpack.c.l.b16 %v323
        %v417 = vunpack.c.h.b16 %v323
        %v418 = vunpack.c.l.b16 %v324
        %v419 = vunpack.c.h.b16 %v324
        %v420 = vunpack.c.l.b16 %v325
        %v421 = vunpack.c.h.b16 %v325
        %v422 = vpack.c.b16 %v392, %v390
        %v423 = vpack.c.b16 %v393, %v391
        %v424 = vpack.c.b16 %v396, %v394
        %v425 = vpack.c.b16 %v397, %v395
        %v426 = vpack.c.b16 %v400, %v398
        %v427 = vpack.c.b16 %v401, %v399
        %v428 = vpack.c.b16 %v404, %v402
        %v429 = vpack.c.b16 %v405, %v403
        %v430 = vpack.c.b16 %v408, %v406
        %v431 = vpack.c.b16 %v409, %v407
        %v432 = vpack.c.b16 %v412, %v410
        %v433 = vpack.c.b16 %v413, %v411
        %v434 = vpack.c.b16 %v416, %v414
        %v435 = vpack.c.b16 %v417, %v415
        %v436 = vpack.c.b16 %v420, %v418
        %v437 = vpack.c.b16 %v421, %v419
        %454 = vmatprep.subr.bf16.mxu0 %v423
        %455 = vmatpush1.bf16.xpose.msra.mxu0 %v422
        %456 = vmatprep.subr.bf16.mxu0 %v425
        %457 = vmatpush1.bf16.xpose.msra.mxu0 %v424
        %458 = vmatprep.subr.bf16.mxu0 %v427
        %459 = vmatpush1.bf16.xpose.msra.mxu0 %v426
        %460 = vmatprep.subr.bf16.mxu0 %v429
        %461 = vmatpush1.bf16.xpose.msra.mxu0 %v428
        %462 = vmatprep.subr.bf16.mxu0 %v431
        %463 = vmatpush1.bf16.xpose.msra.mxu0 %v430
        %464 = vmatprep.subr.bf16.mxu0 %v433
        %465 = vmatpush1.bf16.xpose.msra.mxu0 %v432
        %466 = vmatprep.subr.bf16.mxu0 %v435
        %467 = vmatpush1.bf16.xpose.msra.mxu0 %v434
        %468 = vmatprep.subr.bf16.mxu0 %v437
        %469 = vmatpush1.bf16.xpose.msra.mxu0 %v436
        %470 = vmatprep.subr.bf16.mxu0 0
        %471 = vmatpush1.bf16.xpose.msra.mxu0 0
        %472 = vmatprep.subr.bf16.mxu0 0
        %473 = vmatpush1.bf16.xpose.msra.mxu0 0
        %474 = vmatprep.subr.bf16.mxu0 0
        %475 = vmatpush1.bf16.xpose.msra.mxu0 0
        %476 = vmatprep.subr.bf16.mxu0 0
        %477 = vmatpush1.bf16.xpose.msra.mxu0 0
        %478 = vmatprep.subr.bf16.mxu0 0
        %479 = vmatpush1.bf16.xpose.msra.mxu0 0
        %480 = vmatprep.subr.bf16.mxu0 0
        %481 = vmatpush1.bf16.xpose.msra.mxu0 0
        %482 = vmatprep.subr.bf16.mxu0 0
        %483 = vmatpush1.bf16.xpose.msra.mxu0 0
        %484 = vmatprep.subr.bf16.mxu0 0
        %485 = vmatpush1.bf16.xpose.msra.mxu0 0
        %486 = vmatprep.mubr.bf16.mxu0 %v371
        %487 = vmatmul.mubr.bf16.gmra.mrb[0].mxu0 %v370
        %v488 = vpop.f32.mrb[0].mxu0
        %v489 = vadd.f32 0.0, %v488
        %v490 = vpop.f32.mrb[0].mxu0
        %v491 = vpop.f32.mrb[0].mxu0
        %v492 = vpop.f32.mrb[0].mxu0
        %493 = vdwg.mxu0
        %v494 = vadd.f32 %v366, %v489
        %495 = vst [vmem:[#allocation2] sm:$0xff] %v494
        %v496 = vpack.c.bf16 %v364, %v364
        %v497 = vpack.c.bf16 %v365, %v365
        %vm498 = vcmask 1043456
        %v501 = vsel %vm498, %v496, 1065369472
        %v504 = vsel %vm498, %v497, 1065369472
        %v506 = vld [vmem:[#allocation3] sm:$0xff]
        %v507 = vld [vmem:[#allocation3 + $0x8] sm:$0xff]
        %508 = vmatprep.subr.bf16.mxu0 %v423
        %509 = vmatpush1.bf16.xpose.msra.mxu0 %v422
        %510 = vmatprep.subr.bf16.mxu0 %v425
        %511 = vmatpush1.bf16.xpose.msra.mxu0 %v424
        %512 = vmatprep.subr.bf16.mxu0 %v427
        %513 = vmatpush1.bf16.xpose.msra.mxu0 %v426
        %514 = vmatprep.subr.bf16.mxu0 %v429
        %515 = vmatpush1.bf16.xpose.msra.mxu0 %v428
        %516 = vmatprep.subr.bf16.mxu0 %v431
        %517 = vmatpush1.bf16.xpose.msra.mxu0 %v430
        %518 = vmatprep.subr.bf16.mxu0 %v433
        %519 = vmatpush1.bf16.xpose.msra.mxu0 %v432
        %520 = vmatprep.subr.bf16.mxu0 %v435
        %521 = vmatpush1.bf16.xpose.msra.mxu0 %v434
        %522 = vmatprep.subr.bf16.mxu0 %v437
        %523 = vmatpush1.bf16.xpose.msra.mxu0 %v436
        %524 = vmatprep.subr.bf16.mxu0 0
        %525 = vmatpush1.bf16.xpose.msra.mxu0 0
        %526 = vmatprep.subr.bf16.mxu0 0
        %527 = vmatpush1.bf16.xpose.msra.mxu0 0
        %528 = vmatprep.subr.bf16.mxu0 0
        %529 = vmatpush1.bf16.xpose.msra.mxu0 0
        %530 = vmatprep.subr.bf16.mxu0 0
        %531 = vmatpush1.bf16.xpose.msra.mxu0 0
        %532 = vmatprep.subr.bf16.mxu0 0
        %533 = vmatpush1.bf16.xpose.msra.mxu0 0
        %534 = vmatprep.subr.bf16.mxu0 0
        %535 = vmatpush1.bf16.xpose.msra.mxu0 0
        %536 = vmatprep.subr.bf16.mxu0 0
        %537 = vmatpush1.bf16.xpose.msra.mxu0 0
        %538 = vmatprep.subr.bf16.mxu0 0
        %539 = vmatpush1.bf16.xpose.msra.mxu0 0
        %540 = vmatprep.mubr.bf16.mxu0 %v504
        %541 = vmatmul.mubr.bf16.gmra.mrb[0].mxu0 %v501
        %v542 = vpop.f32.mrb[0].mxu0
        %v543 = vadd.f32 0.0, %v542
        %v544 = vpop.f32.mrb[0].mxu0
        %v545 = vpop.f32.mrb[0].mxu0
        %v546 = vadd.f32 0.0, %v545
        %v547 = vpop.f32.mrb[0].mxu0
        %548 = vdwg.mxu0
        %v549 = vadd.f32 %v506, %v543
        %v550 = vadd.f32 %v507, %v546
        %551 = vst [vmem:[#allocation3] sm:$0xff] %v549
        %552 = vst [vmem:[#allocation3 + $0x8] sm:$0xff] %v550
        %v553 = vld [vmem:[#allocation4] sm:$0xff]
        %v554 = vadd.f32 %v356, %v357
        %555 = vadd.xlane.f32.xlu0 %v554
        %v556 = vpop.xlane.xlu0 %555
        %v557 = vadd.f32 %v553, %v556
        %vm558 = vcmask 7168
        %559 = vst.msk [vmem:[#allocation4] sm:$0xff] %vm558, %v557
        %v560 = vld [vmem:[#allocation5] sm:$0xff]
        %v561 = vadd.f32 %v364, %v365
        %562 = vadd.xlane.f32.xlu0 %v561
        %v563 = vpop.xlane.xlu0 %562
        %v564 = vadd.f32 %v560, %v563
        %565 = vst.msk [vmem:[#allocation5] sm:$0xff] %vm558, %v564
        %p566 = scmp.eq.s32.totalorder %s30, 3
        // Predicated region
        $region49: #{tpu_custom_call.1} parent=31 // pred_check
          %p567 = pneg %p566
        $region50: #{tpu_custom_call.1} parent=31 // pred_check_branch
          %569 = sbr.rel (%p567) target = $region52
        $region51: #{tpu_custom_call.1} parent=31 // pred_region
          %v570 = vld [vmem:[#allocation3] sm:$0xff]
          %v571 = vld [vmem:[#allocation3 + $0x8] sm:$0x1]
          %v572 = vld [vmem:[#allocation4] sm:$0xff]
          %v573 = vld [vmem:[#allocation2] sm:$0xff]
          %575 = vset.pattern.permute.xlu0 0
          %576 = vperm.xlu0 %575, %v572
          %v577 = vpop.permute.xlu0 %576
          %v579 = vsub.f32 %v577, %v573
          %v580 = vmul.f32 %v579, 0.001
          %v581 = vld [vmem:[#allocation5] sm:$0xff]
          %583 = vset.pattern.permute.xlu0 0
          %584 = vperm.xlu0 %583, %v581
          %v585 = vpop.permute.xlu0 %584
          %v587 = vlaneseq
          %v588 = vshrl.u32 %v587, 7
          %v589 = vsub.s32 0, %v588
          %v590 = vrot.slane %v571, %v589
          %v591 = vadd.f32 %v585, %v590
          %v592 = vadd.f32 %v591, 1.0
          %v593 = vmul.f32 %v570, 2.0
          %v594 = vadd.f32 %v593, 1.0
          %v595 = vrcp.pop %v592
          %v596 = vmul.f32 %v594, %v595
          %v597 = vsub.f32 1.0, %v596
          %v598 = vadd.f32 %v580, %v597
          %v599 = vld [vmem:[%s261] sm:$0xff]
          %v600 = vadd.f32 %v598, %v599
          %601 = vst [vmem:[%s293] sm:$0xff] %v600
        $region52: #{tpu_custom_call.1} parent=31 // pred_fallthru
          _
        %s602 = sand.u32 %s136, 1
        %s603 = scalar_lea.sflag [#allocation8], %s602
        %s604 = sand.u32 %s136, 1
        %s605 = smul.addr %s604, 8
        %s606 = scalar_lea.vmem [#allocation12], %s605
        // Predicated region
        $region53: #{tpu_custom_call.1} parent=31 // pred_check
          %p607 = pneg %p146
        $region54: #{tpu_custom_call.1} parent=31 // pred_check_branch
          %609 = sbr.rel (%p607) target = $region56
        $region55: #{tpu_custom_call.1} parent=31 // pred_region
          %s611 = ssub.s32 128, 128
          %612 = vsyncadd %s603, %s611
          %s613 = sadd.s32 %s29, %s28
          %s614 = smul.addr %s613, 128
          %s615 = scalar_lea.hbm %s3, %s614
          %s617 = sshll.u32 %s606, 4
          %s618 = int_to_ptr.vmem [resolvable:$true] %s617
          %620 = dma.vmem_to_hbm [thread:$0]  %s618, 128, %s615, %s603
        $region56: #{tpu_custom_call.1} parent=31 // pred_fallthru
          _
      $region32: #{tpu_custom_call.1} parent=5 // pred_fallthru
        _
      %p621 = scmp.le.s32.totalorder 2, %s18
      // Predicated region
      $region57: #{tpu_custom_call.1} parent=5 // pred_check
        %p622 = pneg %p621
      $region58: #{tpu_custom_call.1} parent=5 // pred_check_branch
        %624 = sbr.rel (%p622) target = $region60
      $region59: #{tpu_custom_call.1} parent=5 // pred_region
        %s625 = ssub.s32 %s18, 2
        // Predicated region
        $region61: #{tpu_custom_call.1} parent=59 // pred_check
          %p626 = pneg %p152
        $region62: #{tpu_custom_call.1} parent=59 // pred_check_branch
          %628 = sbr.rel (%p626) target = $region64
        $region63: #{tpu_custom_call.1} parent=59 // pred_region
          %s629 = sand.u32 %s137, 1
          %s630 = scalar_lea.sflag [#allocation8], %s629
          %s631 = sand.u32 %s137, 1
          %s632 = smul.addr %s631, 8
          %s633 = scalar_lea.vmem [#allocation12], %s632
          %634 = dma.done %s630, 128
        $region64: #{tpu_custom_call.1} parent=59 // pred_fallthru
          _
      $region60: #{tpu_custom_call.1} parent=5 // pred_fallthru
        _
    $region6: #{tpu_custom_call.1} parent=1 // loop_footer
      %s22 = sadd.s32 1, %s18
    $region7: #{tpu_custom_call.1} parent=1 // loop_footer_branch
      %17 = sbr.rel target = $region3
    $region8: #{tpu_custom_call.1} parent=1 // loop_exit
      _
    %635 = vsyncpa [#allocation7], 1
    %s636 = scalar_lea.sflag [#allocation7], 1
    %637 = vsyncpa %s636, 1
    %638 = vsyncpa [#allocation10], 1
    %s639 = scalar_lea.sflag [#allocation10], 1
    %640 = vsyncpa %s639, 1
    %641 = vsyncpa [#allocation8], 1
    %s642 = scalar_lea.sflag [#allocation8], 1
    %643 = vsyncpa %s642, 1

</llo_original>
